<compile_context>
chip_gen: v7x
topology: tpu7x:2x2x1
jax: 0.10.0
libtpu: 0.0.40
codegen_flags: <defaults>
</compile_context>

<pallas_src>
import jax
import jax.numpy as jnp
from jax.experimental import pallas as pl
from jax.experimental.pallas import tpu as pltpu


# ----------------------------------------------------------------------------
# Packing configuration (lane-dense slab).
# ----------------------------------------------------------------------------
_LANES = 512          # slab last dim: multiple of 128 -> unmasked full-lane stores
_SUBLANES = 8         # f32 sublane quantum; rows padded to a multiple of this
_MAX_TILE_ROWS = 1024 # (1024, 512) f32 block = 2 MiB; in+out double-buffered = 8 MiB VMEM


def _round_up(x: int, m: int) -> int:
    return ((x + m - 1) // m) * m


# ----------------------------------------------------------------------------
# Pallas kernel: identity materialization of one lane-dense slab tile.
# ----------------------------------------------------------------------------
def _copy_kernel(src_ref, dst_ref):
    # Whole tile resident in VMEM; elementwise identity (pure DMA-bound copy).
    dst_ref[...] = src_ref[...]


def _materialize_slab(slab: jnp.ndarray, tile_rows: int) -> jnp.ndarray:
    """One fused pallas_call over the packed parameter slab."""
    rows, cols = slab.shape
    grid = (rows // tile_rows,)
    return pl.pallas_call(
        _copy_kernel,
        out_shape=jax.ShapeDtypeStruct(slab.shape, slab.dtype),
        grid=grid,
        in_specs=[pl.BlockSpec((tile_rows, cols), lambda i: (i, 0))],
        out_specs=pl.BlockSpec((tile_rows, cols), lambda i: (i, 0)),
        # Identity copy: let XLA alias the output buffer onto the input buffer
        # instead of allocating + writing a fresh HBM buffer.
        input_output_aliases={0: 0},
        compiler_params=pltpu.CompilerParams(
            # Row tiles are independent -> shard across TensorCores (v7x megacore).
            dimension_semantics=("parallel",),
        ),
    )(slab)


# ----------------------------------------------------------------------------
# Parameter packing: flatten + concat every parameter into one (rows, 512) slab.
# Done once at construction time; only metadata (offset, size, shape) is needed
# to slice the per-parameter views back out of the materialized slab.
# ----------------------------------------------------------------------------
def _pack_params(params: dict):
    layout = {}
    flats = []
    offset = 0
    for name, p in params.items():
        size = int(p.size)
        layout[name] = (offset, size, tuple(p.shape))
        flats.append(p.reshape(-1).astype(jnp.float32))
        offset += size
    total = offset

    rows = max(_SUBLANES, _round_up(pl.cdiv(max(total, 1), _LANES), _SUBLANES))
    if rows <= _MAX_TILE_ROWS:
        tile_rows = rows                      # single full-slab block
    else:
        tile_rows = _MAX_TILE_ROWS            # large case: tiled 1-D grid
        rows = _round_up(rows, tile_rows)

    flat = jnp.concatenate(flats) if flats else jnp.zeros((0,), jnp.float32)
    pad = rows * _LANES - total
    if pad > 0:
        flat = jnp.concatenate([flat, jnp.zeros((pad,), jnp.float32)])
    slab = flat.reshape(rows, _LANES)
    return slab, layout, tile_rows


# ----------------------------------------------------------------------------
# The Parameters "module": deterministic in-script parameter construction.
# ----------------------------------------------------------------------------
_INIT_FNS = {
    "zeros": lambda key, shape: jnp.zeros(shape, jnp.float32),
    "ones": lambda key, shape: jnp.ones(shape, jnp.float32),
    "randn": lambda key, shape: jax.random.normal(key, shape, jnp.float32),
}


class ParametersPallas:
    """JAX/Pallas equivalent of the PyTorch `Parameters` module."""

    def __init__(self, parameters_config, key):
        # TODO(synk): values of 'randn' won't bit-match torch.randn (different RNG).
        self.params = {}
        for name, cfg in parameters_config.items():
            init_name = cfg.get("init") or "zeros"
            key, sub = jax.random.split(key)
            self.params[str(name)] = _INIT_FNS[init_name](sub, tuple(cfg["shape"]))

        # Pack once at construction time (not on the hot path).
        self._slab, self._layout, self._tile_rows = _pack_params(self.params)

    def __call__(self, void: jnp.ndarray) -> dict:
        # forward(void) ignores `void` and returns the named parameters,
        # materialized through ONE fused Pallas copy kernel.
        del void
        if not self._layout:
            return {}
        out_slab = _materialize_slab(self._slab, self._tile_rows)
        flat = out_slab.reshape(-1)
        out = {}
        for name, (offset, size, shape) in self._layout.items():
            out[name] = flat[offset:offset + size].reshape(shape)
        return out


# ----------------------------------------------------------------------------
# Demo / self-test
# ----------------------------------------------------------------------------
if __name__ == "__main__":
    key = jax.random.PRNGKey(0)

    # Synthetic "omegaconf" parameters config (deterministic, in-script).
    parameters_config = {
        "weight": {"init": "zeros", "shape": [4, 32]},
        "bias": {"init": "ones", "shape": [32]},
        "embedding": {"init": "randn", "shape": [2, 4, 16]},
    }

    key, mkey, vkey = jax.random.split(key, 3)
    module = ParametersPallas(parameters_config, mkey)

    # `void` input -- ignored by the forward, as in the PyTorch module.
    void = jax.random.normal(vkey, (2, 4, 16, 16), jnp.float32)

    out = module(void)
    out = jax.tree_util.tree_map(jax.block_until_ready, out)

    # Verify the Pallas-materialized parameters match the registered ones.
    ok = True
    for name, p in module.params.items():
        o = out[name]
        ok &= (o.shape == p.shape) and (o.dtype == p.dtype)
        ok &= bool(jnp.allclose(o, p))
    assert set(out.keys()) == set(parameters_config.keys())
    assert ok

    print("KERNEL_OK")
</pallas_src>

<mosaic_0001>
module attributes {stable_mosaic.version = 11 : i64} {
  func.func @_copy_kernel(%arg0: i32, %arg1: memref<8x512xf32, #tpu.memory_space<vmem>>, %arg2: memref<8x512xf32, #tpu.memory_space<vmem>>) attributes {dimension_semantics = [#tpu.dimension_semantics<parallel>], iteration_bounds = array<i64: 1>, scalar_prefetch = 0 : i64, scratch_operands = 0 : i64, tpu.core_type = #tpu.core_type<tc>, window_params = [{transform_indices = @transform_0, window_bounds = array<i64: 8, 512>}, {transform_indices = @transform_1, window_bounds = array<i64: 8, 512>}]} {
    %c0 = arith.constant 0 : index
    %c0_0 = arith.constant 0 : index
    %0 = vector.load %arg1[%c0, %c0_0] : memref<8x512xf32, #tpu.memory_space<vmem>>, vector<8x512xf32>
    %c0_1 = arith.constant 0 : index
    %c0_2 = arith.constant 0 : index
    %1 = vector.load %arg2[%c0_1, %c0_2] : memref<8x512xf32, #tpu.memory_space<vmem>>, vector<8x512xf32>
    tpu.vector_store %arg2[%c0_1, %c0_2], %0 {strides = array<i32>} : memref<8x512xf32, #tpu.memory_space<vmem>>, vector<8x512xf32>,
    return
  }
  func.func @transform_0(%arg0: i32) -> (i32, i32) {
    %c0_i32 = arith.constant 0 : i32
    %c0_i32_0 = arith.constant 0 : i32
    return %arg0, %c0_i32 : i32, i32
  }
  func.func @transform_1(%arg0: i32) -> (i32, i32) {
    %c0_i32 = arith.constant 0 : i32
    %c0_i32_0 = arith.constant 0 : i32
    return %arg0, %c0_i32 : i32, i32
  }
}

</mosaic_0001>

<llo_original>
// kernel: tpu_custom_call.1
$region0: #{tpu_custom_call.1}
  #allocation0 [shape = 'u32[]', space=smem, size = 0x4, offset = 0x4, fixed_abs, tag = 'smem constant byte address 0x4 - core index']
  #allocation1 [shape = 'u32[144,128]{1,0:T(1,128)}', space=vmem, size = 0x12000, scoped, tag = 'internal scratch']
  %s0 = inlined_call_operand.hbm [shape: f32[8,512], index: 0, kind: input, shape index: {}, may-alias: {0,1}]
  %s1 = inlined_call_operand.hbm [shape: f32[8,512], index: 1, kind: output, shape index: {}, may-alias: {0,1}]
  %s2 = sld [smem:[#allocation0]]
  $region18: #{tpu_custom_call.1} parent=0
    _
  %s4 = ssub.s32 1, %s2
  %s5 = scalar_select 0, %s4, %s2
  $region1: #{tpu_custom_call.1} parent=0
    #allocation2 [shape = 'u8[16384]{0}', space=vmem, size = 0x4000, scoped, tag = 'input window, operand 0, single buffered']
    #allocation3 [shape = 's32[1]{0}', space=sflag, size = 0x4, scoped, tag = 'scoped memory for tpu_custom_call.1']
    #allocation4 [shape = 's32[1]{0}', space=sflag, size = 0x4, scoped, tag = 'scoped memory for tpu_custom_call.1']
    #allocation5 [shape = 'u8[16384]{0}', space=vmem, size = 0x4000, scoped, tag = 'output window, operand 0, single buffered']
    %6 = vsyncpa [#allocation3], 0
    %7 = vsyncpa [#allocation4], 0
    // Predicated region
    $region2: #{tpu_custom_call.1} parent=1 // pred_check
      _
    $region3: #{tpu_custom_call.1} parent=1 // pred_check_branch
      %9 = sbr.rel (0) target = $region5
    $region4: #{tpu_custom_call.1} parent=1 // pred_region
      %s11 = ssub.s32 512, 512
      %12 = vsyncadd [#allocation3], %s11
      %s14 = sshll.u32 [#allocation2], 4
      %s15 = int_to_ptr.vmem [resolvable:$true] %s14
      %17 = dma.hbm_to_vmem [thread:$0]  %s0, 512, %s15, [#allocation3]
    $region5: #{tpu_custom_call.1} parent=1 // pred_fallthru
      _
    // Predicated region
    $region6: #{tpu_custom_call.1} parent=1 // pred_check
      _
    $region7: #{tpu_custom_call.1} parent=1 // pred_check_branch
      %19 = sbr.rel (0) target = $region9
    $region8: #{tpu_custom_call.1} parent=1 // pred_region
      %20 = dma.done [#allocation3], 512
    $region9: #{tpu_custom_call.1} parent=1 // pred_fallthru
      _
    %v21 = vld [vmem:[#allocation2] sm:$0xff]
    %v22 = vld [vmem:[#allocation2 + $0x8] sm:$0xff]
    %v23 = vld [vmem:[#allocation2 + $0x10] sm:$0xff]
    %v24 = vld [vmem:[#allocation2 + $0x18] sm:$0xff]
    %25 = vst [vmem:[#allocation5] sm:$0xff] %v21
    %26 = vst [vmem:[#allocation5 + $0x8] sm:$0xff] %v22
    %27 = vst [vmem:[#allocation5 + $0x10] sm:$0xff] %v23
    %28 = vst [vmem:[#allocation5 + $0x18] sm:$0xff] %v24
    // Predicated region
    $region10: #{tpu_custom_call.1} parent=1 // pred_check
      _
    $region11: #{tpu_custom_call.1} parent=1 // pred_check_branch
      %30 = sbr.rel (0) target = $region13
    $region12: #{tpu_custom_call.1} parent=1 // pred_region
      %s32 = ssub.s32 512, 512
      %33 = vsyncadd [#allocation4], %s32
      %s35 = sshll.u32 [#allocation5], 4
      %s36 = int_to_ptr.vmem [resolvable:$true] %s35
      %38 = dma.vmem_to_hbm [thread:$0]  %s36, 512, %s1, [#allocation4]
    $region13: #{tpu_custom_call.1} parent=1 // pred_fallthru
      _
    // Predicated region
    $region14: #{tpu_custom_call.1} parent=1 // pred_check
      _
    $region15: #{tpu_custom_call.1} parent=1 // pred_check_branch
      %40 = sbr.rel (0) target = $region17
    $region16: #{tpu_custom_call.1} parent=1 // pred_region
      %41 = dma.done [#allocation4], 512
    $region17: #{tpu_custom_call.1} parent=1 // pred_fallthru
      _
    %42 = vsyncpa [#allocation3], 1
    %43 = vsyncpa [#allocation4], 1

</llo_original>
